<compile_context>
chip_gen: v6e
topology: v6e:2x2x1
jax: 0.10.0
libtpu: 0.0.40
codegen_flags: <defaults>
</compile_context>

<pallas_src>
import functools

import jax
import jax.numpy as jnp
from jax.experimental import pallas as pl
from jax.experimental.pallas import tpu as pltpu

EPS = 1e-5  # nn.BatchNorm2d default


def _round_up(x, m):
    return (x + m - 1) // m * m


def _default_tile_n():
    """256-wide N tiles on v6e/v7x (2x256x256 MXU), 128 on older chips."""
    try:
        kind = jax.devices()[0].device_kind.lower()
    except Exception:
        kind = ""
    return 256 if ("v6" in kind or "v7" in kind) else 128


def _conv_stats_kernel(x_ref, w_ref, y_ref, stats_ref, *, tile_n, resident_w):
    """One im2col matmul per tile + per-channel f32 sum / sumsq.

    x_ref    : [TILE_M, K_pad]               im2col rows (compute dtype)
    w_ref    : [K_pad, Cout_pad] (resident)  or [K_pad, TILE_N] (streamed)
    y_ref    : [TILE_M, TILE_N]              conv output tile (compute dtype)
    stats_ref: [1, 2, TILE_N]                row 0 = sum, row 1 = sumsq (f32)
    """
    if resident_w:
        j = pl.program_id(1)
        off = pl.multiple_of(j * tile_n, tile_n)
        w = w_ref[:, pl.ds(off, tile_n)]
    else:
        w = w_ref[...]

    acc = jnp.dot(x_ref[...], w, preferred_element_type=jnp.float32)
    y_ref[...] = acc.astype(y_ref.dtype)

    # Padded rows / K-columns of the im2col matrix are zero and there is no bias
    # add, so padded rows contribute exactly 0 to the statistics (no mask needed).
    s = jnp.sum(acc, axis=0, keepdims=True)          # [1, TILE_N] f32
    ss = jnp.sum(acc * acc, axis=0, keepdims=True)   # [1, TILE_N] f32
    stats_ref[...] = jnp.concatenate([s, ss], axis=0)[None]


@functools.partial(jax.jit, static_argnames=("compute_dtype",))
def block_forward(x_nchw, conv_w_oihw, conv_b, gamma, beta,
                  compute_dtype=jnp.bfloat16):
    """Forward of Block(Conv2d(Cin,Cout,3,pad=1), bn_pillow_planes=Cout).

    x_nchw: [N, Cin, H, W] f32.  Returns [N, Cout, H, W] f32.
    compute_dtype: dtype of the matmul operands and the conv intermediate
    (bf16 default; the accumulator and BN statistics are always f32).
    conv_b is accepted for API parity but cancels exactly under BN mean
    subtraction, so it is not used in the fused forward.
    """
    del conv_b  # cancels under batch-norm mean subtraction
    N, Cin, H, W = x_nchw.shape
    Cout = conv_w_oihw.shape[0]
    M = N * H * W
    K = 9 * Cin

    itemsize = jnp.dtype(compute_dtype).itemsize
    K_pad = _round_up(K, 128)

    TILE_N = min(_default_tile_n(), _round_up(Cout, 128))
    Cout_pad = _round_up(Cout, TILE_N)
    num_n = Cout_pad // TILE_N

    # Weight residency: keep the whole packed weight matrix in VMEM when it is
    # small and there is more than one channel tile (otherwise the streamed spec
    # is already resident because its block index is constant).
    w_bytes = K_pad * Cout_pad * itemsize
    resident_w = (w_bytes <= (8 << 20)) and (num_n > 1)

    # Row tile: start large, shrink to the VMEM budget, then guarantee >= 2 grid
    # points so both TensorCores (v7x) / megacore halves get work.
    TILE_M = 512 if M >= 512 else _round_up(M, 16)
    VMEM_BUDGET = 44 << 20

    def _vmem_need(tm):
        x_b = 2 * tm * K_pad * itemsize                      # double-buffered x
        y_b = 2 * tm * TILE_N * itemsize                     # double-buffered y
        w_b = w_bytes if resident_w else 2 * K_pad * TILE_N * itemsize
        st_b = 2 * 2 * TILE_N * 4
        return x_b + y_b + w_b + st_b

    while _vmem_need(TILE_M) > VMEM_BUDGET and TILE_M > 16:
        TILE_M = max(16, _round_up(TILE_M // 2, 16))

    num_m = pl.cdiv(M, TILE_M)
    while num_m * num_n < 2 and TILE_M >= 32:
        TILE_M = max(16, _round_up(TILE_M // 2, 16))
        num_m = pl.cdiv(M, TILE_M)
    M_pad = num_m * TILE_M

    # ---- glue (XLA): NCHW->NHWC, halo pad, im2col pack, channel padding ------
    x_nhwc = jnp.transpose(x_nchw, (0, 2, 3, 1))
    xpad = jnp.pad(x_nhwc, ((0, 0), (1, 1), (1, 1), (0, 0)))
    taps = [xpad[:, kh:kh + H, kw:kw + W, :]
            for kh in range(3) for kw in range(3)]
    im2col = jnp.concatenate(taps, axis=-1).reshape(M, K).astype(compute_dtype)
    im2col = jnp.pad(im2col, ((0, M_pad - M), (0, K_pad - K)))
    # TODO(synk): for large Cin (>= 64) an in-kernel halo scheme (9 accumulated
    # matmuls over a padded NHWC row tile) avoids materializing the 9x-expanded
    # im2col stream through HBM; not needed at these channel counts.

    # weights: OIHW -> (kh, kw, Cin, Cout) -> [9*Cin, Cout], zero-pad, cast
    w_mat = jnp.transpose(conv_w_oihw, (2, 3, 1, 0)).reshape(K, Cout)
    w_mat = jnp.pad(w_mat, ((0, K_pad - K), (0, Cout_pad - Cout))).astype(compute_dtype)

    # ---- single Pallas pass: tiled conv matmul + per-tile BN partial sums ----
    kernel = functools.partial(_conv_stats_kernel, tile_n=TILE_N,
                               resident_w=resident_w)
    if resident_w:
        w_spec = pl.BlockSpec((K_pad, Cout_pad), lambda i, j: (0, 0))
    else:
        w_spec = pl.BlockSpec((K_pad, TILE_N), lambda i, j: (0, j))

    y_conv, stats = pl.pallas_call(
        kernel,
        out_shape=(jax.ShapeDtypeStruct((M_pad, Cout_pad), compute_dtype),
                   jax.ShapeDtypeStruct((num_m, 2, Cout_pad), jnp.float32)),
        grid_spec=pltpu.PrefetchScalarGridSpec(
            num_scalar_prefetch=0,
            grid=(num_m, num_n),
            in_specs=[pl.BlockSpec((TILE_M, K_pad), lambda i, j: (i, 0)),
                      w_spec],
            out_specs=[pl.BlockSpec((TILE_M, TILE_N), lambda i, j: (i, j)),
                       pl.BlockSpec((1, 2, TILE_N), lambda i, j: (i, 0, j))]),
        compiler_params=pltpu.CompilerParams(
            dimension_semantics=("parallel", "parallel"),
            vmem_limit_bytes=48 << 20),
    )(im2col, w_mat)

    # ---- global BN statistics (tiny cross-tile reduction, real channels only) -
    sums = jnp.sum(stats[:, 0, :Cout], axis=0)
    sumsq = jnp.sum(stats[:, 1, :Cout], axis=0)
    mean = sums / M
    var = jnp.maximum(sumsq / M - mean * mean, 0.0)    # biased, as BN training
    # TODO(synk): E[y^2]-E[y]^2 in f32 can lose precision when |mean| >> std; a
    # two-pass (mean-subtracted) variance would be more robust if that arises.
    inv_std = jax.lax.rsqrt(var + EPS)
    scale = gamma * inv_std                            # [Cout]
    shift = beta - mean * scale                        # [Cout] (conv bias cancels)

    # ---- epilogue in XLA: per-channel affine fused with NHWC->NCHW transpose --
    y = y_conv[:M, :Cout].astype(jnp.float32)
    out_nhwc = (y * scale + shift).reshape(N, H, W, Cout)
    return jnp.transpose(out_nhwc, (0, 3, 1, 2))


def _reference(x_nchw, conv_w_oihw, conv_b, gamma, beta):
    """Pure-JAX reference matching the PyTorch Block semantics (with conv bias)."""
    y = jax.lax.conv_general_dilated(
        x_nchw, conv_w_oihw, window_strides=(1, 1), padding="SAME",
        dimension_numbers=("NCHW", "OIHW", "NCHW"))
    y = y + conv_b[None, :, None, None]
    mean = jnp.mean(y, axis=(0, 2, 3), keepdims=True)
    var = jnp.mean((y - mean) ** 2, axis=(0, 2, 3), keepdims=True)  # biased
    yn = (y - mean) * jax.lax.rsqrt(var + EPS)
    return yn * gamma[None, :, None, None] + beta[None, :, None, None]


if __name__ == "__main__":
    key = jax.random.PRNGKey(0)
    k_x, k_w, k_b, k_g = jax.random.split(key, 4)

    N, Cin, Cout, H, W = 2, 4, 8, 16, 16

    x = jax.random.normal(k_x, (N, Cin, H, W), dtype=jnp.float32)
    conv_w = jax.random.normal(k_w, (Cout, Cin, 3, 3), dtype=jnp.float32) * 0.1
    conv_b = jax.random.normal(k_b, (Cout,), dtype=jnp.float32) * 0.1
    gamma = jax.random.uniform(k_g, (Cout,), dtype=jnp.float32)   # .uniform_()
    beta = jnp.zeros((Cout,), dtype=jnp.float32)                  # zeros

    ref = jax.block_until_ready(_reference(x, conv_w, conv_b, gamma, beta))

    # f32 operand path: tight numerical check against the reference.
    out_f32 = jax.block_until_ready(
        block_forward(x, conv_w, conv_b, gamma, beta, compute_dtype=jnp.float32))
    assert out_f32.shape == (N, Cout, H, W)
    err32 = float(jnp.max(jnp.abs(out_f32 - ref)))
    assert err32 < 1e-3, f"f32 max err {err32}"

    # default perf path (bf16 operands + bf16 intermediate, f32 accum/stats).
    out_def = jax.block_until_ready(block_forward(x, conv_w, conv_b, gamma, beta))
    errbf = float(jnp.max(jnp.abs(out_def - ref)))
    assert errbf < 2e-1, f"bf16 max err {errbf}"

    print("KERNEL_OK")
</pallas_src>

<mosaic_0001>
module attributes {stable_mosaic.version = 11 : i64} {
  func.func @_conv_stats_kernel(%arg0: i32, %arg1: i32, %arg2: memref<256x128xf32, #tpu.memory_space<vmem>>, %arg3: memref<128x128xf32, #tpu.memory_space<vmem>>, %arg4: memref<256x128xf32, #tpu.memory_space<vmem>>, %arg5: memref<1x2x128xf32, #tpu.memory_space<vmem>>) attributes {dimension_semantics = [#tpu.dimension_semantics<parallel>, #tpu.dimension_semantics<parallel>], iteration_bounds = array<i64: 2, 1>, scalar_prefetch = 0 : i64, scratch_operands = 0 : i64, tpu.core_type = #tpu.core_type<tc>, window_params = [{transform_indices = @transform_0, window_bounds = array<i64: 256, 128>}, {transform_indices = @transform_1, window_bounds = array<i64: 128, 128>}, {transform_indices = @transform_2, window_bounds = array<i64: 256, 128>}, {transform_indices = @transform_3, window_bounds = array<i64: 1, 2, 128>}]} {
    %c0 = arith.constant 0 : index
    %c0_0 = arith.constant 0 : index
    %0 = vector.load %arg3[%c0, %c0_0] : memref<128x128xf32, #tpu.memory_space<vmem>>, vector<128x128xf32>
    %c0_1 = arith.constant 0 : index
    %c0_2 = arith.constant 0 : index
    %1 = vector.load %arg2[%c0_1, %c0_2] : memref<256x128xf32, #tpu.memory_space<vmem>>, vector<256x128xf32>
    %cst = arith.constant dense<0.000000e+00> : vector<256x128xf32>
    %2 = tpu.matmul %1, %0, %cst {dimension_numbers = #tpu.dot_dimension_numbers<[1], [0], [0], [1], [0, 0, 1, 1], [], []>} : vector<256x128xf32>, vector<128x128xf32>, vector<256x128xf32> -> vector<256x128xf32>
    %c0_3 = arith.constant 0 : index
    %c0_4 = arith.constant 0 : index
    %3 = vector.load %arg4[%c0_3, %c0_4] : memref<256x128xf32, #tpu.memory_space<vmem>>, vector<256x128xf32>
    tpu.vector_store %arg4[%c0_3, %c0_4], %2 {strides = array<i32>} : memref<256x128xf32, #tpu.memory_space<vmem>>, vector<256x128xf32>,
    %cst_5 = arith.constant dense<0.000000e+00> : vector<128xf32>
    %4 = vector.multi_reduction <add>, %2, %cst_5 [0] : vector<256x128xf32> to vector<128xf32>
    %5 = vector.shape_cast %4 : vector<128xf32> to vector<1x128xf32>
    %6 = arith.mulf %2, %2 : vector<256x128xf32>
    %cst_6 = arith.constant dense<0.000000e+00> : vector<128xf32>
    %7 = vector.multi_reduction <add>, %6, %cst_6 [0] : vector<256x128xf32> to vector<128xf32>
    %8 = vector.shape_cast %7 : vector<128xf32> to vector<1x128xf32>
    %9 = tpu.concatenate %5, %8 in 0 : vector<1x128xf32>, vector<1x128xf32> -> vector<2x128xf32>
    %10 = vector.shape_cast %9 : vector<2x128xf32> to vector<1x2x128xf32>
    %c0_7 = arith.constant 0 : index
    %c0_8 = arith.constant 0 : index
    %c0_9 = arith.constant 0 : index
    %11 = vector.load %arg5[%c0_7, %c0_8, %c0_9] : memref<1x2x128xf32, #tpu.memory_space<vmem>>, vector<1x2x128xf32>
    tpu.vector_store %arg5[%c0_7, %c0_8, %c0_9], %10 {strides = array<i32>} : memref<1x2x128xf32, #tpu.memory_space<vmem>>, vector<1x2x128xf32>,
    return
  }
  func.func @transform_0(%arg0: i32, %arg1: i32) -> (i32, i32) {
    %c0_i32 = arith.constant 0 : i32
    %c0_i32_0 = arith.constant 0 : i32
    return %arg0, %c0_i32 : i32, i32
  }
  func.func @transform_1(%arg0: i32, %arg1: i32) -> (i32, i32) {
    %c0_i32 = arith.constant 0 : i32
    %c0_i32_0 = arith.constant 0 : i32
    return %c0_i32, %arg1 : i32, i32
  }
  func.func @transform_2(%arg0: i32, %arg1: i32) -> (i32, i32) {
    %c0_i32 = arith.constant 0 : i32
    return %arg0, %arg1 : i32, i32
  }
  func.func @transform_3(%arg0: i32, %arg1: i32) -> (i32, i32, i32) {
    %c0_i32 = arith.constant 0 : i32
    %c0_i32_0 = arith.constant 0 : i32
    return %arg0, %c0_i32, %arg1 : i32, i32, i32
  }
}

</mosaic_0001>

<llo_original>
// kernel: block_forward.1
$region0: #{block_forward.1}
  #allocation0 [shape = 'u32[]', space=smem, size = 0x4, offset = 0x4, fixed_abs, tag = 'smem constant byte address 0x4 - core index']
  #allocation1 [shape = 'u32[144,128]{1,0:T(1,128)}', space=vmem, size = 0x12000, scoped, tag = 'internal scratch']
  %s0 = inlined_call_operand.vmem [shape: f32[512,128], index: 0, kind: input, shape index: {}]
  %s1 = inlined_call_operand.vmem [shape: f32[128,128], index: 1, kind: input, shape index: {}]
  %s2 = inlined_call_operand.vmem [shape: f32[512,128], index: 2, kind: output, shape index: {0}]
  %s3 = inlined_call_operand.vmem [shape: f32[2,2,128], index: 3, kind: output, shape index: {1}]
  %4 = xla_tuple %s2, %s3
  %s5 = sld [smem:[#allocation0]]
  $region49: #{block_forward.1} parent=0
    _
  %s7 = ssub.s32 1, %s5
  %s8 = scalar_select 0, %s7, %s5
  loop: start=0, step=1, limit=4
  $region2: #{block_forward.1} parent=0 // loop_pre_header
    _
  $region3: #{block_forward.1} parent=0 // loop_header
    %s10 = sphi 0, %s14
    %p11 = scmp.ge.s32.totalorder %s10, 4
    %s17 = sphi 0, %s29
    %s18 = sphi 0, %s25
    %s19 = sphi 0, %s17
    %s20 = sphi 0, %s18
    %s21 = sphi 0, %s19
    %s22 = sphi 0, %s20
    %s32 = sphi 0, %s34
    %s35 = sphi 0, %s32
    %s36 = sphi 0, %s35
    %s52 = sphi 0, %s36
    %s58 = sphi 0, %s60
    %s61 = sphi 0, %s58
    %s62 = sphi 0, %s61
    %s78 = sphi 0, %s62
    %s86 = sphi 0, %s88
    %s89 = sphi 0, %s86
    %s90 = sphi 0, %s89
    %s106 = sphi 0, %s90
    %s114 = sphi 0, %s116
    %s117 = sphi 0, %s114
    %s118 = sphi 0, %s117
    %s134 = sphi 0, %s118
  $region4: #{block_forward.1} parent=0 // loop_header_branch
    %13 = sbr.rel (%p11) target = $region8
  $region5: #{block_forward.1} parent=0 // loop_body
    %s15 = ssub.s32 %s10, 1
    %s16 = ssub.s32 %s10, 2
    %s23 = sadd.s32 1, %s18
    %p24 = scmp.ge.s32.totalorder %s23, 1
    %s25 = scalar_select %p24, 0, %s23
    %s26 = sadd.s32 1, %s17
    %s27 = scalar_select %p24, %s26, %s17
    %p28 = scmp.ge.s32.totalorder %s27, 2
    %s29 = scalar_select %p28, 0, %s27
    %s30 = ssub.s32 %s17, %s29
    %p31 = scmp.eq.s32.totalorder %s30, 0
    %s33 = sadd.s32 %s32, 1
    %s34 = scalar_select %p31, %s32, %s33
    %p37 = pneg %p31
    %p38 = scmp.eq.s32.totalorder %s10, 1
    %p39 = por %p37, %p38
    %p40 = scmp.ne.s32.totalorder %s32, %s35
    %p41 = scmp.eq.s32.totalorder %s10, 0
    %p42 = por %p40, %p41
    %p43 = scmp.ne.s32.totalorder %s32, %s35
    %p44 = scmp.eq.s32.totalorder %s15, 1
    %p45 = por %p43, %p44
    %p46 = scmp.ne.s32.totalorder %s35, %s36
    %p47 = scmp.eq.s32.totalorder %s15, 0
    %p48 = por %p46, %p47
    %p49 = scmp.ne.s32.totalorder %s35, %s36
    %p50 = scmp.eq.s32.totalorder %s16, 1
    %p51 = por %p49, %p50
    %p53 = scmp.ne.s32.totalorder %s36, %s52
    %p54 = scmp.eq.s32.totalorder %s16, 0
    %p55 = por %p53, %p54
    %s56 = ssub.s32 %s18, %s25
    %p57 = scmp.eq.s32.totalorder %s56, 0
    %s59 = sadd.s32 %s58, 1
    %s60 = scalar_select %p57, %s58, %s59
    %p63 = pneg %p57
    %p64 = scmp.eq.s32.totalorder %s10, 1
    %p65 = por %p63, %p64
    %p66 = scmp.ne.s32.totalorder %s58, %s61
    %p67 = scmp.eq.s32.totalorder %s10, 0
    %p68 = por %p66, %p67
    %p69 = scmp.ne.s32.totalorder %s58, %s61
    %p70 = scmp.eq.s32.totalorder %s15, 1
    %p71 = por %p69, %p70
    %p72 = scmp.ne.s32.totalorder %s61, %s62
    %p73 = scmp.eq.s32.totalorder %s15, 0
    %p74 = por %p72, %p73
    %p75 = scmp.ne.s32.totalorder %s61, %s62
    %p76 = scmp.eq.s32.totalorder %s16, 1
    %p77 = por %p75, %p76
    %p79 = scmp.ne.s32.totalorder %s62, %s78
    %p80 = scmp.eq.s32.totalorder %s16, 0
    %p81 = por %p79, %p80
    %s82 = ssub.s32 %s17, %s29
    %s83 = ssub.s32 %s18, %s25
    %s84 = sor.u32 %s82, %s83
    %p85 = scmp.eq.s32.totalorder %s84, 0
    %s87 = sadd.s32 %s86, 1
    %s88 = scalar_select %p85, %s86, %s87
    %p91 = pneg %p85
    %p92 = scmp.eq.s32.totalorder %s10, 1
    %p93 = por %p91, %p92
    %p94 = scmp.ne.s32.totalorder %s86, %s89
    %p95 = scmp.eq.s32.totalorder %s10, 0
    %p96 = por %p94, %p95
    %p97 = scmp.ne.s32.totalorder %s86, %s89
    %p98 = scmp.eq.s32.totalorder %s15, 1
    %p99 = por %p97, %p98
    %p100 = scmp.ne.s32.totalorder %s89, %s90
    %p101 = scmp.eq.s32.totalorder %s15, 0
    %p102 = por %p100, %p101
    %p103 = scmp.ne.s32.totalorder %s89, %s90
    %p104 = scmp.eq.s32.totalorder %s16, 1
    %p105 = por %p103, %p104
    %p107 = scmp.ne.s32.totalorder %s90, %s106
    %p108 = scmp.eq.s32.totalorder %s16, 0
    %p109 = por %p107, %p108
    %s110 = ssub.s32 %s17, %s29
    %s111 = ssub.s32 %s18, %s25
    %s112 = sor.u32 %s110, %s111
    %p113 = scmp.eq.s32.totalorder %s112, 0
    %s115 = sadd.s32 %s114, 1
    %s116 = scalar_select %p113, %s114, %s115
    %p119 = pneg %p113
    %p120 = scmp.eq.s32.totalorder %s10, 1
    %p121 = por %p119, %p120
    %p122 = scmp.ne.s32.totalorder %s114, %s117
    %p123 = scmp.eq.s32.totalorder %s10, 0
    %p124 = por %p122, %p123
    %p125 = scmp.ne.s32.totalorder %s114, %s117
    %p126 = scmp.eq.s32.totalorder %s15, 1
    %p127 = por %p125, %p126
    %p128 = scmp.ne.s32.totalorder %s117, %s118
    %p129 = scmp.eq.s32.totalorder %s15, 0
    %p130 = por %p128, %p129
    %p131 = scmp.ne.s32.totalorder %s117, %s118
    %p132 = scmp.eq.s32.totalorder %s16, 1
    %p133 = por %p131, %p132
    %p135 = scmp.ne.s32.totalorder %s118, %s134
    %p136 = scmp.eq.s32.totalorder %s16, 0
    %p137 = por %p135, %p136
    %p138 = scmp.le.s32.totalorder 1, %s10
    %p139 = scmp.lt.s32.totalorder %s10, 3
    %p140 = pnand %p138, %p139
    %p141 = pneg %p140
    // Predicated region
    $region9: #{block_forward.1} parent=5 // pred_check
      _
    $region10: #{block_forward.1} parent=5 // pred_check_branch
      %143 = sbr.rel (%p140) target = $region12
    $region11: #{block_forward.1} parent=5 // pred_region
      %s144 = ssub.s32 %s10, 1
      // Predicated region
      $region13: #{block_forward.1} parent=11 // pred_check
        %p145 = pneg %p74
      $region14: #{block_forward.1} parent=11 // pred_check_branch
        %147 = sbr.rel (%p145) target = $region16
      $region15: #{block_forward.1} parent=11 // pred_region
        %p148 = scmp.lt.s32.totalorder %s20, 0
        %s149 = scalar_select %p148, %s20, 0
        %s150 = smul.addr %s149, 8
        %s151 = scalar_lea.vmem %s1, %s150
      $region16: #{block_forward.1} parent=11 // pred_fallthru
        _
    $region12: #{block_forward.1} parent=5 // pred_fallthru
      _
    %p152 = scmp.lt.s32.totalorder %s10, 2
    // Predicated region
    $region17: #{block_forward.1} parent=5 // pred_check
      %p153 = pneg %p152
    $region18: #{block_forward.1} parent=5 // pred_check_branch
      %155 = sbr.rel (%p153) target = $region20
    $region19: #{block_forward.1} parent=5 // pred_region
      // Predicated region
      $region21: #{block_forward.1} parent=19 // pred_check
        %p156 = pneg %p42
      $region22: #{block_forward.1} parent=19 // pred_check_branch
        %158 = sbr.rel (%p156) target = $region24
      $region23: #{block_forward.1} parent=19 // pred_region
        %s159 = smul.u32 32, %s17
        %p160 = scmp.lt.s32.totalorder %s159, 63
        %s161 = scalar_select %p160, %s159, 63
        %s162 = smul.addr %s161, 8
        %s163 = scalar_lea.vmem %s0, %s162
        %s164 = smul.u32 32, %s17
      $region24: #{block_forward.1} parent=19 // pred_fallthru
        _
    $region20: #{block_forward.1} parent=5 // pred_fallthru
      _
    %p165 = scmp.le.s32.totalorder 1, %s10
    %p166 = scmp.lt.s32.totalorder %s10, 3
    %p167 = pnand %p165, %p166
    %p168 = pneg %p167
    // Predicated region
    $region25: #{block_forward.1} parent=5 // pred_check
      _
    $region26: #{block_forward.1} parent=5 // pred_check_branch
      %170 = sbr.rel (%p167) target = $region28
    $region27: #{block_forward.1} parent=5 // pred_region
      %s171 = ssub.s32 %s10, 1
      %s172 = smul.u32 32, %s19
      %p173 = scmp.lt.s32.totalorder %s172, 63
      %s174 = scalar_select %p173, %s172, 63
      %s175 = smul.addr %s174, 8
      %s176 = scalar_lea.vmem %s0, %s175
      %p177 = pneg %p48
      %p178 = pneg %p45
      %p179 = scmp.lt.s32.totalorder %s20, 0
      %s180 = scalar_select %p179, %s20, 0
      %s181 = smul.addr %s180, 8
      %s182 = scalar_lea.vmem %s1, %s181
      %p183 = pneg %p74
      %p184 = pneg %p71
      %p185 = pneg %p102
      %p186 = pneg %p99
      %s187 = smul.u32 32, %s19
      %p188 = scmp.lt.s32.totalorder %s187, 63
      %s189 = scalar_select %p188, %s187, 63
      %p190 = scmp.lt.s32.totalorder %s20, 0
      %s191 = scalar_select %p190, %s20, 0
      %s192 = sadd.s32 %s191, %s189
      %s193 = smul.addr %s192, 8
      %s194 = scalar_lea.vmem %s2, %s193
      %p195 = pneg %p130
      %p196 = pneg %p127
      %p197 = scmp.lt.s32.totalorder %s19, 1
      %s198 = scalar_select %p197, %s19, 1
      %p199 = scmp.lt.s32.totalorder %s20, 0
      %s200 = scalar_select %p199, %s20, 0
      %s201 = sadd.s32 %s200, %s198
      %s202 = smul.addr %s201, 2
      %s203 = scalar_lea.vmem %s3, %s202
      %s204 = smul.u32 32, %s19
      %p205 = scmp.lt.s32.totalorder %s204, 63
      %s206 = scalar_select %p205, %s204, 63
      %s207 = smul.addr %s206, 8
      %s208 = scalar_lea.vmem %s0, %s207
      %s209 = smul.u32 32, %s19
      %p210 = scmp.lt.s32.totalorder %s20, 0
      %s211 = scalar_select %p210, %s20, 0
      %s212 = smul.addr %s211, 8
      %s213 = scalar_lea.vmem %s1, %s212
      %s214 = smul.u32 32, %s19
      %p215 = scmp.lt.s32.totalorder %s214, 63
      %s216 = scalar_select %p215, %s214, 63
      %p217 = scmp.lt.s32.totalorder %s20, 0
      %s218 = scalar_select %p217, %s20, 0
      %s219 = sadd.s32 %s218, %s216
      %s220 = smul.addr %s219, 8
      %s221 = scalar_lea.vmem %s2, %s220
      %s222 = smul.u32 32, %s19
      %p223 = scmp.lt.s32.totalorder %s19, 1
      %s224 = scalar_select %p223, %s19, 1
      %p225 = scmp.lt.s32.totalorder %s20, 0
      %s226 = scalar_select %p225, %s20, 0
      %s227 = sadd.s32 %s226, %s224
      %s228 = smul.addr %s227, 2
      %s229 = scalar_lea.vmem %s3, %s228
      %v230 = vld [vmem:[%s213] sm:$0xff]
      %v231 = vld [vmem:[%s213 + $0x8] sm:$0xff]
      %v232 = vld [vmem:[%s213 + $0x10] sm:$0xff]
      %v233 = vld [vmem:[%s213 + $0x18] sm:$0xff]
      %v234 = vld [vmem:[%s213 + $0x20] sm:$0xff]
      %v235 = vld [vmem:[%s213 + $0x28] sm:$0xff]
      %v236 = vld [vmem:[%s213 + $0x30] sm:$0xff]
      %v237 = vld [vmem:[%s213 + $0x38] sm:$0xff]
      %v238 = vld [vmem:[%s213 + $0x40] sm:$0xff]
      %v239 = vld [vmem:[%s213 + $0x48] sm:$0xff]
      %v240 = vld [vmem:[%s213 + $0x50] sm:$0xff]
      %v241 = vld [vmem:[%s213 + $0x58] sm:$0xff]
      %v242 = vld [vmem:[%s213 + $0x60] sm:$0xff]
      %v243 = vld [vmem:[%s213 + $0x68] sm:$0xff]
      %v244 = vld [vmem:[%s213 + $0x70] sm:$0xff]
      %v245 = vld [vmem:[%s213 + $0x78] sm:$0xff]
      %v246 = vld [vmem:[%s208] sm:$0xff]
      %v247 = vld [vmem:[%s208 + $0x8] sm:$0xff]
      %v248 = vld [vmem:[%s208 + $0x10] sm:$0xff]
      %v249 = vld [vmem:[%s208 + $0x18] sm:$0xff]
      %v250 = vld [vmem:[%s208 + $0x20] sm:$0xff]
      %v251 = vld [vmem:[%s208 + $0x28] sm:$0xff]
      %v252 = vld [vmem:[%s208 + $0x30] sm:$0xff]
      %v253 = vld [vmem:[%s208 + $0x38] sm:$0xff]
      %v254 = vld [vmem:[%s208 + $0x40] sm:$0xff]
      %v255 = vld [vmem:[%s208 + $0x48] sm:$0xff]
      %v256 = vld [vmem:[%s208 + $0x50] sm:$0xff]
      %v257 = vld [vmem:[%s208 + $0x58] sm:$0xff]
      %v258 = vld [vmem:[%s208 + $0x60] sm:$0xff]
      %v259 = vld [vmem:[%s208 + $0x68] sm:$0xff]
      %v260 = vld [vmem:[%s208 + $0x70] sm:$0xff]
      %v261 = vld [vmem:[%s208 + $0x78] sm:$0xff]
      %v262 = vld [vmem:[%s208 + $0x80] sm:$0xff]
      %v263 = vld [vmem:[%s208 + $0x88] sm:$0xff]
      %v264 = vld [vmem:[%s208 + $0x90] sm:$0xff]
      %v265 = vld [vmem:[%s208 + $0x98] sm:$0xff]
      %v266 = vld [vmem:[%s208 + $0xa0] sm:$0xff]
      %v267 = vld [vmem:[%s208 + $0xa8] sm:$0xff]
      %v268 = vld [vmem:[%s208 + $0xb0] sm:$0xff]
      %v269 = vld [vmem:[%s208 + $0xb8] sm:$0xff]
      %v270 = vld [vmem:[%s208 + $0xc0] sm:$0xff]
      %v271 = vld [vmem:[%s208 + $0xc8] sm:$0xff]
      %v272 = vld [vmem:[%s208 + $0xd0] sm:$0xff]
      %v273 = vld [vmem:[%s208 + $0xd8] sm:$0xff]
      %v274 = vld [vmem:[%s208 + $0xe0] sm:$0xff]
      %v275 = vld [vmem:[%s208 + $0xe8] sm:$0xff]
      %v276 = vld [vmem:[%s208 + $0xf0] sm:$0xff]
      %v277 = vld [vmem:[%s208 + $0xf8] sm:$0xff]
      %278 = vmatprep.subr.mxu0 0.0
      %279 = vmatpush1.msra.mxu0 %v245
      %280 = vmatprep.subr.mxu0 0.0
      %281 = vmatpush1.msra.mxu0 %v244
      %282 = vmatprep.subr.mxu0 0.0
      %283 = vmatpush1.msra.mxu0 %v243
      %284 = vmatprep.subr.mxu0 0.0
      %285 = vmatpush1.msra.mxu0 %v242
      %286 = vmatprep.subr.mxu0 0.0
      %287 = vmatpush1.msra.mxu0 %v241
      %288 = vmatprep.subr.mxu0 0.0
      %289 = vmatpush1.msra.mxu0 %v240
      %290 = vmatprep.subr.mxu0 0.0
      %291 = vmatpush1.msra.mxu0 %v239
      %292 = vmatprep.subr.mxu0 0.0
      %293 = vmatpush1.msra.mxu0 %v238
      %294 = vmatprep.subr.mxu0 0.0
      %295 = vmatpush1.msra.mxu0 %v237
      %296 = vmatprep.subr.mxu0 0.0
      %297 = vmatpush1.msra.mxu0 %v236
      %298 = vmatprep.subr.mxu0 0.0
      %299 = vmatpush1.msra.mxu0 %v235
      %300 = vmatprep.subr.mxu0 0.0
      %301 = vmatpush1.msra.mxu0 %v234
      %302 = vmatprep.subr.mxu0 0.0
      %303 = vmatpush1.msra.mxu0 %v233
      %304 = vmatprep.subr.mxu0 0.0
      %305 = vmatpush1.msra.mxu0 %v232
      %306 = vmatprep.subr.mxu0 0.0
      %307 = vmatpush1.msra.mxu0 %v231
      %308 = vmatprep.subr.mxu0 0.0
      %309 = vmatpush1.msra.mxu0 %v230
      %310 = vmatprep.subr.mxu0 0.0
      %311 = vmatpush2.msra.mxu0 0.0
      %312 = vmatprep.subr.mxu0 0.0
      %313 = vmatpush2.msra.mxu0 0.0
      %314 = vmatprep.subr.mxu0 0.0
      %315 = vmatpush2.msra.mxu0 0.0
      %316 = vmatprep.subr.mxu0 0.0
      %317 = vmatpush2.msra.mxu0 0.0
      %318 = vmatprep.subr.mxu0 0.0
      %319 = vmatpush2.msra.mxu0 0.0
      %320 = vmatprep.subr.mxu0 0.0
      %321 = vmatpush2.msra.mxu0 0.0
      %322 = vmatprep.subr.mxu0 0.0
      %323 = vmatpush2.msra.mxu0 0.0
      %324 = vmatprep.subr.mxu0 0.0
      %325 = vmatpush2.msra.mxu0 0.0
      %326 = vmatprep.subr.mxu0 0.0
      %327 = vmatpush2.msra.mxu0 0.0
      %328 = vmatprep.subr.mxu0 0.0
      %329 = vmatpush2.msra.mxu0 0.0
      %330 = vmatprep.subr.mxu0 0.0
      %331 = vmatpush2.msra.mxu0 0.0
      %332 = vmatprep.subr.mxu0 0.0
      %333 = vmatpush2.msra.mxu0 0.0
      %334 = vmatprep.subr.mxu0 0.0
      %335 = vmatpush2.msra.mxu0 0.0
      %336 = vmatprep.subr.mxu0 0.0
      %337 = vmatpush2.msra.mxu0 0.0
      %338 = vmatprep.subr.mxu0 0.0
      %339 = vmatpush2.msra.mxu0 0.0
      %340 = vmatprep.subr.mxu0 0.0
      %341 = vmatpush2.msra.mxu0 0.0
      %342 = vmatprep.mubr.f32.mxu0 0.0
      %343 = vmatmul.mubr.f32.gmra.mxu0 %v246
      %v344 = vpop.f32.mrf.mxu0
      %v345 = vadd.f32 0.0, %v344
      %v346 = vpop.f32.mrf.mxu0
      %347 = vmatprep.mubr.f32.mxu0 0.0
      %348 = vmatmul.mubr.f32.gmra.mxu0 %v247
      %v349 = vpop.f32.mrf.mxu0
      %v350 = vadd.f32 0.0, %v349
      %v351 = vpop.f32.mrf.mxu0
      %352 = vmatprep.mubr.f32.mxu0 0.0
      %353 = vmatmul.mubr.f32.gmra.mxu0 %v248
      %v354 = vpop.f32.mrf.mxu0
      %v355 = vadd.f32 0.0, %v354
      %v356 = vpop.f32.mrf.mxu0
      %357 = vmatprep.mubr.f32.mxu0 0.0
      %358 = vmatmul.mubr.f32.gmra.mxu0 %v249
      %v359 = vpop.f32.mrf.mxu0
      %v360 = vadd.f32 0.0, %v359
      %v361 = vpop.f32.mrf.mxu0
      %362 = vmatprep.mubr.f32.mxu0 0.0
      %363 = vmatmul.mubr.f32.gmra.mxu0 %v250
      %v364 = vpop.f32.mrf.mxu0
      %v365 = vadd.f32 0.0, %v364
      %v366 = vpop.f32.mrf.mxu0
      %367 = vmatprep.mubr.f32.mxu0 0.0
      %368 = vmatmul.mubr.f32.gmra.mxu0 %v251
      %v369 = vpop.f32.mrf.mxu0
      %v370 = vadd.f32 0.0, %v369
      %v371 = vpop.f32.mrf.mxu0
      %372 = vmatprep.mubr.f32.mxu0 0.0
      %373 = vmatmul.mubr.f32.gmra.mxu0 %v252
      %v374 = vpop.f32.mrf.mxu0
      %v375 = vadd.f32 0.0, %v374
      %v376 = vpop.f32.mrf.mxu0
      %377 = vmatprep.mubr.f32.mxu0 0.0
      %378 = vmatmul.mubr.f32.gmra.mxu0 %v253
      %v379 = vpop.f32.mrf.mxu0
      %v380 = vadd.f32 0.0, %v379
      %v381 = vpop.f32.mrf.mxu0
      %382 = vmatprep.mubr.f32.mxu0 0.0
      %383 = vmatmul.mubr.f32.gmra.mxu0 %v254
      %v384 = vpop.f32.mrf.mxu0
      %v385 = vadd.f32 0.0, %v384
      %v386 = vpop.f32.mrf.mxu0
      %387 = vmatprep.mubr.f32.mxu0 0.0
      %388 = vmatmul.mubr.f32.gmra.mxu0 %v255
      %v389 = vpop.f32.mrf.mxu0
      %v390 = vadd.f32 0.0, %v389
      %v391 = vpop.f32.mrf.mxu0
      %392 = vmatprep.mubr.f32.mxu0 0.0
      %393 = vmatmul.mubr.f32.gmra.mxu0 %v256
      %v394 = vpop.f32.mrf.mxu0
      %v395 = vadd.f32 0.0, %v394
      %v396 = vpop.f32.mrf.mxu0
      %397 = vmatprep.mubr.f32.mxu0 0.0
      %398 = vmatmul.mubr.f32.gmra.mxu0 %v257
      %v399 = vpop.f32.mrf.mxu0
      %v400 = vadd.f32 0.0, %v399
      %v401 = vpop.f32.mrf.mxu0
      %402 = vmatprep.mubr.f32.mxu0 0.0
      %403 = vmatmul.mubr.f32.gmra.mxu0 %v258
      %v404 = vpop.f32.mrf.mxu0
      %v405 = vadd.f32 0.0, %v404
      %v406 = vpop.f32.mrf.mxu0
      %407 = vmatprep.mubr.f32.mxu0 0.0
      %408 = vmatmul.mubr.f32.gmra.mxu0 %v259
      %v409 = vpop.f32.mrf.mxu0
      %v410 = vadd.f32 0.0, %v409
      %v411 = vpop.f32.mrf.mxu0
      %412 = vmatprep.mubr.f32.mxu0 0.0
      %413 = vmatmul.mubr.f32.gmra.mxu0 %v260
      %v414 = vpop.f32.mrf.mxu0
      %v415 = vadd.f32 0.0, %v414
      %v416 = vpop.f32.mrf.mxu0
      %417 = vmatprep.mubr.f32.mxu0 0.0
      %418 = vmatmul.mubr.f32.gmra.mxu0 %v261
      %v419 = vpop.f32.mrf.mxu0
      %v420 = vadd.f32 0.0, %v419
      %v421 = vpop.f32.mrf.mxu0
      %422 = vmatprep.mubr.f32.mxu0 0.0
      %423 = vmatmul.mubr.f32.gmra.mxu0 %v262
      %v424 = vpop.f32.mrf.mxu0
      %v425 = vadd.f32 0.0, %v424
      %v426 = vpop.f32.mrf.mxu0
      %427 = vmatprep.mubr.f32.mxu0 0.0
      %428 = vmatmul.mubr.f32.gmra.mxu0 %v263
      %v429 = vpop.f32.mrf.mxu0
      %v430 = vadd.f32 0.0, %v429
      %v431 = vpop.f32.mrf.mxu0
      %432 = vmatprep.mubr.f32.mxu0 0.0
      %433 = vmatmul.mubr.f32.gmra.mxu0 %v264
      %v434 = vpop.f32.mrf.mxu0
      %v435 = vadd.f32 0.0, %v434
      %v436 = vpop.f32.mrf.mxu0
      %437 = vmatprep.mubr.f32.mxu0 0.0
      %438 = vmatmul.mubr.f32.gmra.mxu0 %v265
      %v439 = vpop.f32.mrf.mxu0
      %v440 = vadd.f32 0.0, %v439
      %v441 = vpop.f32.mrf.mxu0
      %442 = vmatprep.mubr.f32.mxu0 0.0
      %443 = vmatmul.mubr.f32.gmra.mxu0 %v266
      %v444 = vpop.f32.mrf.mxu0
      %v445 = vadd.f32 0.0, %v444
      %v446 = vpop.f32.mrf.mxu0
      %447 = vmatprep.mubr.f32.mxu0 0.0
      %448 = vmatmul.mubr.f32.gmra.mxu0 %v267
      %v449 = vpop.f32.mrf.mxu0
      %v450 = vadd.f32 0.0, %v449
      %v451 = vpop.f32.mrf.mxu0
      %452 = vmatprep.mubr.f32.mxu0 0.0
      %453 = vmatmul.mubr.f32.gmra.mxu0 %v268
      %v454 = vpop.f32.mrf.mxu0
      %v455 = vadd.f32 0.0, %v454
      %v456 = vpop.f32.mrf.mxu0
      %457 = vmatprep.mubr.f32.mxu0 0.0
      %458 = vmatmul.mubr.f32.gmra.mxu0 %v269
      %v459 = vpop.f32.mrf.mxu0
      %v460 = vadd.f32 0.0, %v459
      %v461 = vpop.f32.mrf.mxu0
      %462 = vmatprep.mubr.f32.mxu0 0.0
      %463 = vmatmul.mubr.f32.gmra.mxu0 %v270
      %v464 = vpop.f32.mrf.mxu0
      %v465 = vadd.f32 0.0, %v464
      %v466 = vpop.f32.mrf.mxu0
      %467 = vmatprep.mubr.f32.mxu0 0.0
      %468 = vmatmul.mubr.f32.gmra.mxu0 %v271
      %v469 = vpop.f32.mrf.mxu0
      %v470 = vadd.f32 0.0, %v469
      %v471 = vpop.f32.mrf.mxu0
      %472 = vmatprep.mubr.f32.mxu0 0.0
      %473 = vmatmul.mubr.f32.gmra.mxu0 %v272
      %v474 = vpop.f32.mrf.mxu0
      %v475 = vadd.f32 0.0, %v474
      %v476 = vpop.f32.mrf.mxu0
      %477 = vmatprep.mubr.f32.mxu0 0.0
      %478 = vmatmul.mubr.f32.gmra.mxu0 %v273
      %v479 = vpop.f32.mrf.mxu0
      %v480 = vadd.f32 0.0, %v479
      %v481 = vpop.f32.mrf.mxu0
      %482 = vmatprep.mubr.f32.mxu0 0.0
      %483 = vmatmul.mubr.f32.gmra.mxu0 %v274
      %v484 = vpop.f32.mrf.mxu0
      %v485 = vadd.f32 0.0, %v484
      %v486 = vpop.f32.mrf.mxu0
      %487 = vmatprep.mubr.f32.mxu0 0.0
      %488 = vmatmul.mubr.f32.gmra.mxu0 %v275
      %v489 = vpop.f32.mrf.mxu0
      %v490 = vadd.f32 0.0, %v489
      %v491 = vpop.f32.mrf.mxu0
      %492 = vmatprep.mubr.f32.mxu0 0.0
      %493 = vmatmul.mubr.f32.gmra.mxu0 %v276
      %v494 = vpop.f32.mrf.mxu0
      %v495 = vadd.f32 0.0, %v494
      %v496 = vpop.f32.mrf.mxu0
      %497 = vmatprep.mubr.f32.mxu0 0.0
      %498 = vmatmul.mubr.f32.gmra.mxu0 %v277
      %v499 = vpop.f32.mrf.mxu0
      %v500 = vadd.f32 0.0, %v499
      %v501 = vpop.f32.mrf.mxu0
      %502 = vdwg.mxu0
      %503 = vst [vmem:[%s221] sm:$0xff] %v345
      %504 = vst [vmem:[%s221 + $0x8] sm:$0xff] %v350
      %505 = vst [vmem:[%s221 + $0x10] sm:$0xff] %v355
      %506 = vst [vmem:[%s221 + $0x18] sm:$0xff] %v360
      %507 = vst [vmem:[%s221 + $0x20] sm:$0xff] %v365
      %508 = vst [vmem:[%s221 + $0x28] sm:$0xff] %v370
      %509 = vst [vmem:[%s221 + $0x30] sm:$0xff] %v375
      %510 = vst [vmem:[%s221 + $0x38] sm:$0xff] %v380
      %511 = vst [vmem:[%s221 + $0x40] sm:$0xff] %v385
      %512 = vst [vmem:[%s221 + $0x48] sm:$0xff] %v390
      %513 = vst [vmem:[%s221 + $0x50] sm:$0xff] %v395
      %514 = vst [vmem:[%s221 + $0x58] sm:$0xff] %v400
      %515 = vst [vmem:[%s221 + $0x60] sm:$0xff] %v405
      %516 = vst [vmem:[%s221 + $0x68] sm:$0xff] %v410
      %517 = vst [vmem:[%s221 + $0x70] sm:$0xff] %v415
      %518 = vst [vmem:[%s221 + $0x78] sm:$0xff] %v420
      %519 = vst [vmem:[%s221 + $0x80] sm:$0xff] %v425
      %520 = vst [vmem:[%s221 + $0x88] sm:$0xff] %v430
      %521 = vst [vmem:[%s221 + $0x90] sm:$0xff] %v435
      %522 = vst [vmem:[%s221 + $0x98] sm:$0xff] %v440
      %523 = vst [vmem:[%s221 + $0xa0] sm:$0xff] %v445
      %524 = vst [vmem:[%s221 + $0xa8] sm:$0xff] %v450
      %525 = vst [vmem:[%s221 + $0xb0] sm:$0xff] %v455
      %526 = vst [vmem:[%s221 + $0xb8] sm:$0xff] %v460
      %527 = vst [vmem:[%s221 + $0xc0] sm:$0xff] %v465
      %528 = vst [vmem:[%s221 + $0xc8] sm:$0xff] %v470
      %529 = vst [vmem:[%s221 + $0xd0] sm:$0xff] %v475
      %530 = vst [vmem:[%s221 + $0xd8] sm:$0xff] %v480
      %531 = vst [vmem:[%s221 + $0xe0] sm:$0xff] %v485
      %532 = vst [vmem:[%s221 + $0xe8] sm:$0xff] %v490
      %533 = vst [vmem:[%s221 + $0xf0] sm:$0xff] %v495
      %534 = vst [vmem:[%s221 + $0xf8] sm:$0xff] %v500
      %v535 = vadd.f32 %v345, %v350
      %v536 = vadd.f32 %v535, %v355
      %v537 = vadd.f32 %v536, %v360
      %v538 = vadd.f32 %v537, %v365
      %v539 = vadd.f32 %v538, %v370
      %v540 = vadd.f32 %v539, %v375
      %v541 = vadd.f32 %v540, %v380
      %v542 = vadd.f32 %v541, %v385
      %v543 = vadd.f32 %v542, %v390
      %v544 = vadd.f32 %v543, %v395
      %v545 = vadd.f32 %v544, %v400
      %v546 = vadd.f32 %v545, %v405
      %v547 = vadd.f32 %v546, %v410
      %v548 = vadd.f32 %v547, %v415
      %v549 = vadd.f32 %v548, %v420
      %v550 = vadd.f32 %v549, %v425
      %v551 = vadd.f32 %v550, %v430
      %v552 = vadd.f32 %v551, %v435
      %v553 = vadd.f32 %v552, %v440
      %v554 = vadd.f32 %v553, %v445
      %v555 = vadd.f32 %v554, %v450
      %v556 = vadd.f32 %v555, %v455
      %v557 = vadd.f32 %v556, %v460
      %v558 = vadd.f32 %v557, %v465
      %v559 = vadd.f32 %v558, %v470
      %v560 = vadd.f32 %v559, %v475
      %v561 = vadd.f32 %v560, %v480
      %v562 = vadd.f32 %v561, %v485
      %v563 = vadd.f32 %v562, %v490
      %v564 = vadd.f32 %v563, %v495
      %v565 = vadd.f32 %v564, %v500
      %v566 = vrot.slane %v565, 4
      %v567 = vadd.f32 %v565, %v566
      %v568 = vrot.slane %v567, 2
      %v569 = vadd.f32 %v567, %v568
      %v570 = vrot.slane %v569, 1
      %v571 = vadd.f32 %v569, %v570
      %v572 = vmul.f32 %v345, %v345
      %v573 = vmul.f32 %v350, %v350
      %v574 = vmul.f32 %v355, %v355
      %v575 = vmul.f32 %v360, %v360
      %v576 = vmul.f32 %v365, %v365
      %v577 = vmul.f32 %v370, %v370
      %v578 = vmul.f32 %v375, %v375
      %v579 = vmul.f32 %v380, %v380
      %v580 = vmul.f32 %v385, %v385
      %v581 = vmul.f32 %v390, %v390
      %v582 = vmul.f32 %v395, %v395
      %v583 = vmul.f32 %v400, %v400
      %v584 = vmul.f32 %v405, %v405
      %v585 = vmul.f32 %v410, %v410
      %v586 = vmul.f32 %v415, %v415
      %v587 = vmul.f32 %v420, %v420
      %v588 = vmul.f32 %v425, %v425
      %v589 = vmul.f32 %v430, %v430
      %v590 = vmul.f32 %v435, %v435
      %v591 = vmul.f32 %v440, %v440
      %v592 = vmul.f32 %v445, %v445
      %v593 = vmul.f32 %v450, %v450
      %v594 = vmul.f32 %v455, %v455
      %v595 = vmul.f32 %v460, %v460
      %v596 = vmul.f32 %v465, %v465
      %v597 = vmul.f32 %v470, %v470
      %v598 = vmul.f32 %v475, %v475
      %v599 = vmul.f32 %v480, %v480
      %v600 = vmul.f32 %v485, %v485
      %v601 = vmul.f32 %v490, %v490
      %v602 = vmul.f32 %v495, %v495
      %v603 = vmul.f32 %v500, %v500
      %v604 = vadd.f32 %v572, %v573
      %v605 = vadd.f32 %v604, %v574
      %v606 = vadd.f32 %v605, %v575
      %v607 = vadd.f32 %v606, %v576
      %v608 = vadd.f32 %v607, %v577
      %v609 = vadd.f32 %v608, %v578
      %v610 = vadd.f32 %v609, %v579
      %v611 = vadd.f32 %v610, %v580
      %v612 = vadd.f32 %v611, %v581
      %v613 = vadd.f32 %v612, %v582
      %v614 = vadd.f32 %v613, %v583
      %v615 = vadd.f32 %v614, %v584
      %v616 = vadd.f32 %v615, %v585
      %v617 = vadd.f32 %v616, %v586
      %v618 = vadd.f32 %v617, %v587
      %v619 = vadd.f32 %v618, %v588
      %v620 = vadd.f32 %v619, %v589
      %v621 = vadd.f32 %v620, %v590
      %v622 = vadd.f32 %v621, %v591
      %v623 = vadd.f32 %v622, %v592
      %v624 = vadd.f32 %v623, %v593
      %v625 = vadd.f32 %v624, %v594
      %v626 = vadd.f32 %v625, %v595
      %v627 = vadd.f32 %v626, %v596
      %v628 = vadd.f32 %v627, %v597
      %v629 = vadd.f32 %v628, %v598
      %v630 = vadd.f32 %v629, %v599
      %v631 = vadd.f32 %v630, %v600
      %v632 = vadd.f32 %v631, %v601
      %v633 = vadd.f32 %v632, %v602
      %v634 = vadd.f32 %v633, %v603
      %v635 = vrot.slane %v634, 4
      %v636 = vadd.f32 %v634, %v635
      %v637 = vrot.slane %v636, 2
      %v638 = vadd.f32 %v636, %v637
      %v639 = vrot.slane %v638, 1
      %v640 = vadd.f32 %v638, %v639
      %vm641 = vcmask 1040384
      %v642 = vsel %vm641, %v571, %v640
      %643 = vst [vmem:[%s229] sm:$0x3] %v642
      %s644 = smul.u32 32, %s19
      %p645 = scmp.lt.s32.totalorder %s644, 63
      %s646 = scalar_select %p645, %s644, 63
      %p647 = scmp.lt.s32.totalorder %s20, 0
      %s648 = scalar_select %p647, %s20, 0
      %s649 = sadd.s32 %s648, %s646
      %s650 = smul.addr %s649, 8
      %s651 = scalar_lea.vmem %s2, %s650
      %p652 = scmp.lt.s32.totalorder %s19, 1
      %s653 = scalar_select %p652, %s19, 1
      %p654 = scmp.lt.s32.totalorder %s20, 0
      %s655 = scalar_select %p654, %s20, 0
      %s656 = sadd.s32 %s655, %s653
      %s657 = smul.addr %s656, 2
      %s658 = scalar_lea.vmem %s3, %s657
      // Predicated region
      $region29: #{block_forward.1} parent=27 // pred_check
        %p659 = pneg %p99
      $region30: #{block_forward.1} parent=27 // pred_check_branch
        %661 = sbr.rel (%p659) target = $region32
      $region31: #{block_forward.1} parent=27 // pred_region
        %s662 = smul.u32 32, %s19
      $region32: #{block_forward.1} parent=27 // pred_fallthru
        _
      // Predicated region
      $region33: #{block_forward.1} parent=27 // pred_check
        %p663 = pneg %p127
      $region34: #{block_forward.1} parent=27 // pred_check_branch
        %665 = sbr.rel (%p663) target = $region36
      $region35: #{block_forward.1} parent=27 // pred_region
        _
      $region36: #{block_forward.1} parent=27 // pred_fallthru
        _
    $region28: #{block_forward.1} parent=5 // pred_fallthru
      _
    %p666 = scmp.le.s32.totalorder 2, %s10
    // Predicated region
    $region37: #{block_forward.1} parent=5 // pred_check
      %p667 = pneg %p666
    $region38: #{block_forward.1} parent=5 // pred_check_branch
      %669 = sbr.rel (%p667) target = $region40
    $region39: #{block_forward.1} parent=5 // pred_region
      %s670 = ssub.s32 %s10, 2
      // Predicated region
      $region41: #{block_forward.1} parent=39 // pred_check
        %p671 = pneg %p105
      $region42: #{block_forward.1} parent=39 // pred_check_branch
        %673 = sbr.rel (%p671) target = $region44
      $region43: #{block_forward.1} parent=39 // pred_region
        %s674 = smul.u32 32, %s21
        %p675 = scmp.lt.s32.totalorder %s674, 63
        %s676 = scalar_select %p675, %s674, 63
        %p677 = scmp.lt.s32.totalorder %s22, 0
        %s678 = scalar_select %p677, %s22, 0
        %s679 = sadd.s32 %s678, %s676
        %s680 = smul.addr %s679, 8
        %s681 = scalar_lea.vmem %s2, %s680
      $region44: #{block_forward.1} parent=39 // pred_fallthru
        _
      // Predicated region
      $region45: #{block_forward.1} parent=39 // pred_check
        %p682 = pneg %p133
      $region46: #{block_forward.1} parent=39 // pred_check_branch
        %684 = sbr.rel (%p682) target = $region48
      $region47: #{block_forward.1} parent=39 // pred_region
        %p685 = scmp.lt.s32.totalorder %s21, 1
        %s686 = scalar_select %p685, %s21, 1
        %p687 = scmp.lt.s32.totalorder %s22, 0
        %s688 = scalar_select %p687, %s22, 0
        %s689 = sadd.s32 %s688, %s686
        %s690 = smul.addr %s689, 2
        %s691 = scalar_lea.vmem %s3, %s690
      $region48: #{block_forward.1} parent=39 // pred_fallthru
        _
    $region40: #{block_forward.1} parent=5 // pred_fallthru
      _
  $region6: #{block_forward.1} parent=0 // loop_footer
    %s14 = sadd.s32 1, %s10
  $region7: #{block_forward.1} parent=0 // loop_footer_branch
    %9 = sbr.rel target = $region3
  $region8: #{block_forward.1} parent=0 // loop_exit
    _

</llo_original>
